<compile_context>
chip_gen: v7x
topology: tpu7x:2x2x1
jax: 0.10.0
libtpu: 0.0.40
codegen_flags: <defaults>
</compile_context>

<pallas_src>
import math

import jax
import jax.numpy as jnp
from jax.experimental import pallas as pl
from jax.experimental.pallas import tpu as pltpu

N_CLASSES = 527
BN_EPS = 1e-5
ACT_DTYPE = jnp.bfloat16      # HBM storage dtype for activations / weights
FC2_PAD = 640                 # 527 padded up to a lane-dense multiple of 128

IRS_SETTING = [
    (1, 16, 1, 1),
    (6, 24, 2, 2),
    (6, 32, 3, 2),
    (6, 64, 4, 2),
    (6, 96, 3, 2),
    (6, 160, 3, 1),
    (6, 320, 1, 1),
]


# ----------------------------------------------------------------------------
# Fused inverted-residual block kernel
# ----------------------------------------------------------------------------
def _block_kernel(H, W, hidden, stride, expand, use_res, col0):
    Ho, Wo = H // stride, W // stride
    S, So = H * W, Ho * Wo

    def kernel(*args):
        i = 0
        x_ref = args[i]; i += 1
        if expand:
            w_exp_ref, b_exp_ref = args[i], args[i + 1]; i += 2
        w_dw_ref, b_dw_ref = args[i], args[i + 1]; i += 2
        w_proj_ref, b_proj_ref = args[i], args[i + 1]; i += 2
        o_ref = args[i]; i += 1
        if S > 1:
            pad_ref, flat_ref = args[i], args[i + 1]

        xv = x_ref[0].astype(jnp.float32)                       # (S, Cin)

        # 1x1 expand conv + BN bias + ReLU6 (BN scale folded into the weights).
        if expand:
            h2d = jnp.dot(xv, w_exp_ref[...].astype(jnp.float32),
                          preferred_element_type=jnp.float32)
            h2d = jnp.clip(h2d + b_exp_ref[...], 0.0, 6.0)      # (S, hidden)
        else:
            h2d = xv                                            # hidden == Cin

        wdw = w_dw_ref[...].astype(jnp.float32)                 # (3, 3, hidden)

        if S == 1:
            # 1x1 spatial: only the centre tap of the padded 3x3 conv sees data.
            z = h2d * wdw[1, 1, :]
            z = jnp.clip(z + b_dw_ref[...], 0.0, 6.0)           # (1, hidden)
        else:
            # Scatter rows into a zero-padded spatial scratch in VMEM (data
            # columns start at the sublane-aligned offset `col0`; the zero ring
            # supplies the conv's pad=1 halo -- no HBM pad pass).
            pad_ref[...] = jnp.zeros(pad_ref.shape, jnp.float32)
            for h in range(H):
                pad_ref[h + 1, col0:col0 + W, :] = h2d[h * W:(h + 1) * W, :]
            xpad = pad_ref[...]                                 # (H+2, col0+W+1, hidden)

            # 3x3 depthwise conv, stride 1, pad 1 (BN scale folded into weights).
            acc = jnp.zeros((H, W, hidden), jnp.float32)
            for dy in range(3):
                for dx in range(3):
                    c = col0 - 1 + dx
                    acc = acc + xpad[dy:dy + H, c:c + W, :] * wdw[dy, dx, :]

            if stride == 1:
                for h in range(H):
                    flat_ref[h * W:(h + 1) * W, :] = acc[h]
            else:
                # Fused AvgPool2d(2) (the BN bias add below commutes with it).
                for ho in range(Ho):
                    rsum = acc[2 * ho] + acc[2 * ho + 1]        # (W, hidden)
                    for wo in range(Wo):
                        r = ho * Wo + wo
                        flat_ref[r:r + 1, :] = 0.25 * (
                            rsum[2 * wo:2 * wo + 1, :]
                            + rsum[2 * wo + 1:2 * wo + 2, :])
            z = jnp.clip(flat_ref[...] + b_dw_ref[...], 0.0, 6.0)   # (So, hidden)

        # 1x1 projection conv + BN bias (no activation) + fused residual add.
        p = jnp.dot(z, w_proj_ref[...].astype(jnp.float32),
                    preferred_element_type=jnp.float32) + b_proj_ref[...]
        if use_res:
            p = p + xv                                          # Cin == Cout, stride == 1
        o_ref[0] = p.astype(o_ref.dtype)

    return kernel


def block_call(x, bp, H, W):
    stride, expand, use_res = bp["stride"], bp["expand"], bp["use_res"]
    cin, hidden, cout = bp["cin"], bp["hidden"], bp["cout"]
    Ho, Wo = H // stride, W // stride
    S, So = H * W, Ho * Wo
    col0 = 8
    B = x.shape[0]

    in_specs = [pl.BlockSpec((1, S, cin), lambda b: (b, 0, 0))]
    args = [x]
    if expand:
        in_specs += [pl.BlockSpec((cin, hidden), lambda b: (0, 0)),
                     pl.BlockSpec((1, hidden), lambda b: (0, 0))]
        args += [bp["w_exp"], bp["b_exp"]]
    in_specs += [pl.BlockSpec((3, 3, hidden), lambda b: (0, 0, 0)),
                 pl.BlockSpec((1, hidden), lambda b: (0, 0)),
                 pl.BlockSpec((hidden, cout), lambda b: (0, 0)),
                 pl.BlockSpec((1, cout), lambda b: (0, 0))]
    args += [bp["w_dw"], bp["b_dw"], bp["w_proj"], bp["b_proj"]]

    scratch = []
    if S > 1:
        scratch = [pltpu.VMEM((H + 2, col0 + W + 1, hidden), jnp.float32),
                   pltpu.VMEM((So, hidden), jnp.float32)]

    return pl.pallas_call(
        _block_kernel(H, W, hidden, stride, expand, use_res, col0),
        out_shape=jax.ShapeDtypeStruct((B, So, cout), ACT_DTYPE),
        grid=(B,),
        in_specs=in_specs,
        out_specs=pl.BlockSpec((1, So, cout), lambda b: (b, 0, 0)),
        scratch_shapes=scratch,
        compiler_params=pltpu.CompilerParams(dimension_semantics=("parallel",)),
    )(*args)


# ----------------------------------------------------------------------------
# conv0 (im2col matmul, pool already folded in front) and fused head
# ----------------------------------------------------------------------------
def _conv0_kernel(x_ref, w_ref, b_ref, o_ref):
    x = x_ref[0].astype(jnp.float32)                            # (S, 9)
    y = jnp.dot(x, w_ref[...].astype(jnp.float32),
                preferred_element_type=jnp.float32)
    o_ref[0] = jnp.clip(y + b_ref[...], 0.0, 6.0).astype(o_ref.dtype)


def conv0_call(patches, w, b):
    B, S, K = patches.shape
    N = w.shape[1]
    return pl.pallas_call(
        _conv0_kernel,
        out_shape=jax.ShapeDtypeStruct((B, S, N), ACT_DTYPE),
        grid=(B,),
        in_specs=[pl.BlockSpec((1, S, K), lambda b: (b, 0, 0)),
                  pl.BlockSpec((K, N), lambda b: (0, 0)),
                  pl.BlockSpec((1, N), lambda b: (0, 0))],
        out_specs=pl.BlockSpec((1, S, N), lambda b: (b, 0, 0)),
        compiler_params=pltpu.CompilerParams(dimension_semantics=("parallel",)),
    )(patches, w, b)


def _head_kernel(Hf, Wf):
    def kernel(x_ref, wl_ref, bl_ref, w1_ref, b1_ref, w2_ref, b2_ref, o_ref):
        x = x_ref[0].astype(jnp.float32)                        # (Hf*Wf, 320)
        # features[-1]: conv_1x1_bn(320, 1280) + ReLU6 (BN scale folded).
        h = jnp.dot(x, wl_ref[...].astype(jnp.float32),
                    preferred_element_type=jnp.float32)
        h = jnp.clip(h + bl_ref[...], 0.0, 6.0)                 # (Hf*Wf, 1280)
        # torch: mean over W (dim 3), then max-over-H + mean-over-H (dim 2).
        rows = [jnp.mean(h[i * Wf:(i + 1) * Wf, :], axis=0, keepdims=True)
                for i in range(Hf)]
        mx = rows[0]
        sm = rows[0]
        for r in rows[1:]:
            mx = jnp.maximum(mx, r)
            sm = sm + r
        pooled = mx + sm * (1.0 / Hf)                           # (1, 1280)
        # fc1 + ReLU, fc_audioset (output padded to 640 lanes).
        z = jnp.maximum(
            jnp.dot(pooled, w1_ref[...].astype(jnp.float32),
                    preferred_element_type=jnp.float32) + b1_ref[...], 0.0)
        out = jnp.dot(z, w2_ref[...].astype(jnp.float32),
                      preferred_element_type=jnp.float32) + b2_ref[...]
        o_ref[0] = out.astype(o_ref.dtype)
    return kernel


def head_call(x, p, Hf, Wf):
    B, S, C = x.shape
    return pl.pallas_call(
        _head_kernel(Hf, Wf),
        out_shape=jax.ShapeDtypeStruct((B, 1, FC2_PAD), jnp.float32),
        grid=(B,),
        in_specs=[pl.BlockSpec((1, S, C), lambda b: (b, 0, 0)),
                  pl.BlockSpec((C, 1280), lambda b: (0, 0)),
                  pl.BlockSpec((1, 1280), lambda b: (0, 0)),
                  pl.BlockSpec((1280, 1024), lambda b: (0, 0)),
                  pl.BlockSpec((1, 1024), lambda b: (0, 0)),
                  pl.BlockSpec((1024, FC2_PAD), lambda b: (0, 0)),
                  pl.BlockSpec((1, FC2_PAD), lambda b: (0, 0))],
        out_specs=pl.BlockSpec((1, 1, FC2_PAD), lambda b: (b, 0, 0)),
        compiler_params=pltpu.CompilerParams(dimension_semantics=("parallel",)),
    )(x, p["conv_last_w"], p["conv_last_b"], p["fc1_w"], p["fc1_b"],
      p["fc2_w"], p["fc2_b"])


# ----------------------------------------------------------------------------
# Parameters (deterministic, synthetic; BN scale folded into weights)
# ----------------------------------------------------------------------------
def _xavier(key, shape, fan_in, fan_out):
    bound = math.sqrt(6.0 / (fan_in + fan_out))
    return jax.random.uniform(key, shape, jnp.float32, -bound, bound)


def _bn_fold(c):
    gamma = jnp.ones((c,), jnp.float32)
    beta = jnp.zeros((c,), jnp.float32)
    mean = jnp.zeros((c,), jnp.float32)
    var = jnp.ones((c,), jnp.float32)
    scale = gamma / jnp.sqrt(var + BN_EPS)
    return scale, beta - mean * scale


def build_params(key):
    it = iter(jax.random.split(key, 64))
    p = {}
    # features[0]: conv_bn(1, 32, 2): Conv2d(1,32,3,p=1) -> AvgPool2d(2) -> BN -> ReLU6
    sc, bi = _bn_fold(32)
    p["conv0_w"] = (_xavier(next(it), (9, 32), 9, 32) * sc[None, :]).astype(ACT_DTYPE)
    p["conv0_b"] = bi.reshape(1, 32)

    blocks = []
    in_ch = 32
    for t, c, n, s in IRS_SETTING:
        for i in range(n):
            stride = s if i == 0 else 1
            hidden = round(in_ch * t)
            bp = {"cin": in_ch, "hidden": hidden, "cout": c,
                  "stride": stride, "expand": t != 1,
                  "use_res": stride == 1 and in_ch == c}
            if t != 1:
                sc, bi = _bn_fold(hidden)
                bp["w_exp"] = (_xavier(next(it), (in_ch, hidden), in_ch, hidden)
                               * sc[None, :]).astype(ACT_DTYPE)
                bp["b_exp"] = bi.reshape(1, hidden)
            sc, bi = _bn_fold(hidden)
            bp["w_dw"] = (_xavier(next(it), (3, 3, hidden), 9, 9)
                          * sc[None, None, :]).astype(ACT_DTYPE)
            bp["b_dw"] = bi.reshape(1, hidden)
            sc, bi = _bn_fold(c)
            bp["w_proj"] = (_xavier(next(it), (hidden, c), hidden, c)
                            * sc[None, :]).astype(ACT_DTYPE)
            bp["b_proj"] = bi.reshape(1, c)
            blocks.append(bp)
            in_ch = c
    p["blocks"] = blocks

    # features[-1]: conv_1x1_bn(320, 1280)
    sc, bi = _bn_fold(1280)
    p["conv_last_w"] = (_xavier(next(it), (in_ch, 1280), in_ch, 1280)
                        * sc[None, :]).astype(ACT_DTYPE)
    p["conv_last_b"] = bi.reshape(1, 1280)

    p["fc1_w"] = _xavier(next(it), (1280, 1024), 1280, 1024).astype(ACT_DTYPE)
    p["fc1_b"] = jnp.zeros((1, 1024), jnp.float32)
    w2 = _xavier(next(it), (1024, N_CLASSES), 1024, N_CLASSES)
    p["fc2_w"] = jnp.pad(w2, ((0, 0), (0, FC2_PAD - N_CLASSES))).astype(ACT_DTYPE)
    p["fc2_b"] = jnp.zeros((1, FC2_PAD), jnp.float32)
    return p


# ----------------------------------------------------------------------------
# Forward pass
# ----------------------------------------------------------------------------
def mobilenetv2_forward(params, x_nchw):
    x = jnp.transpose(x_nchw, (0, 2, 3, 1)).astype(jnp.float32)    # NCHW -> NHWC
    B, H, W, _ = x.shape

    # features[0]: 3x3 conv (Cin=1) as im2col + Pallas matmul.  AvgPool2d(2)
    # commutes with the matmul, so the pool is applied to the tiny patch tensor
    # up front; BN bias + ReLU6 are fused inside the kernel.
    # TODO(synk): the 9-tap im2col stays in plain JAX (one-off (B,H,W,9) tensor);
    # a dedicated in-kernel tap loop would avoid materializing it entirely.
    xp = jnp.pad(x[..., 0], ((0, 0), (1, 1), (1, 1)))
    patches = jnp.stack(
        [xp[:, dy:dy + H, dx:dx + W] for dy in range(3) for dx in range(3)],
        axis=-1)                                                    # (B, H, W, 9)
    Hc, Wc = H // 2, W // 2
    patches = patches.reshape(B, Hc, 2, Wc, 2, 9).mean(axis=(2, 4))
    a = conv0_call(patches.reshape(B, Hc * Wc, 9).astype(ACT_DTYPE),
                   params["conv0_w"], params["conv0_b"])            # (B, Hc*Wc, 32)

    h, w = Hc, Wc
    for bp in params["blocks"]:
        a = block_call(a, bp, h, w)                                 # fused block
        h //= bp["stride"]
        w //= bp["stride"]

    out = head_call(a, params, h, w)                                # (B, 1, 640)
    return out[:, 0, :N_CLASSES]


if __name__ == "__main__":
    key = jax.random.PRNGKey(0)
    k_param, k_x = jax.random.split(key)
    params = build_params(k_param)
    # Smallest spatial size compatible with the network's 5 stride-2 stages.
    x = jax.random.normal(k_x, (2, 1, 32, 32), jnp.float32)
    out = mobilenetv2_forward(params, x)
    out = jax.block_until_ready(out)
    assert out.shape == (2, N_CLASSES), out.shape
    assert bool(jnp.all(jnp.isfinite(out)))
    print("KERNEL_OK")
</pallas_src>

<mosaic_0001>
module attributes {stable_mosaic.version = 11 : i64} {
  func.func @_conv0_kernel(%arg0: i32, %arg1: memref<1x256x9xbf16, #tpu.memory_space<vmem>>, %arg2: memref<9x32xbf16, #tpu.memory_space<vmem>>, %arg3: memref<1x32xf32, #tpu.memory_space<vmem>>, %arg4: memref<1x256x32xbf16, #tpu.memory_space<vmem>>) attributes {dimension_semantics = [#tpu.dimension_semantics<parallel>], iteration_bounds = array<i64: 2>, scalar_prefetch = 0 : i64, scratch_operands = 0 : i64, tpu.core_type = #tpu.core_type<tc>, window_params = [{transform_indices = @transform_0, window_bounds = array<i64: 1, 256, 9>}, {pipeline_mode = #tpu.pipeline_mode<synchronous>, transform_indices = @transform_1, window_bounds = array<i64: 9, 32>}, {pipeline_mode = #tpu.pipeline_mode<synchronous>, transform_indices = @transform_2, window_bounds = array<i64: 1, 32>}, {transform_indices = @transform_3, window_bounds = array<i64: 1, 256, 32>}]} {
    %c0 = arith.constant 0 : index
    %c0_0 = arith.constant 0 : index
    %c0_1 = arith.constant 0 : index
    %0 = vector.load %arg1[%c0, %c0_0, %c0_1] : memref<1x256x9xbf16, #tpu.memory_space<vmem>>, vector<1x256x9xbf16>
    %1 = vector.shape_cast %0 : vector<1x256x9xbf16> to vector<256x9xbf16>
    %2 = arith.extf %1 : vector<256x9xbf16> to vector<256x9xf32>
    %c0_2 = arith.constant 0 : index
    %c0_3 = arith.constant 0 : index
    %3 = vector.load %arg2[%c0_2, %c0_3] : memref<9x32xbf16, #tpu.memory_space<vmem>>, vector<9x32xbf16>
    %4 = arith.extf %3 : vector<9x32xbf16> to vector<9x32xf32>
    %cst = arith.constant dense<0.000000e+00> : vector<256x32xf32>
    %5 = tpu.matmul %2, %4, %cst {dimension_numbers = #tpu.dot_dimension_numbers<[1], [0], [0], [1], [0, 0, 1, 1], [], []>} : vector<256x9xf32>, vector<9x32xf32>, vector<256x32xf32> -> vector<256x32xf32>
    %c0_4 = arith.constant 0 : index
    %c0_5 = arith.constant 0 : index
    %6 = vector.load %arg3[%c0_4, %c0_5] : memref<1x32xf32, #tpu.memory_space<vmem>>, vector<1x32xf32>
    %7 = vector.broadcast %6 : vector<1x32xf32> to vector<256x32xf32>
    %8 = arith.addf %5, %7 : vector<256x32xf32>
    %cst_6 = arith.constant 0.000000e+00 : f32
    %cst_7 = arith.constant 6.000000e+00 : f32
    %9 = vector.broadcast %cst_6 : f32 to vector<256x32xf32>
    %10 = arith.maximumf %9, %8 : vector<256x32xf32>
    %11 = vector.broadcast %cst_7 : f32 to vector<256x32xf32>
    %12 = arith.minimumf %11, %10 : vector<256x32xf32>
    %13 = arith.truncf %12 : vector<256x32xf32> to vector<256x32xbf16>
    %c0_8 = arith.constant 0 : index
    %c0_9 = arith.constant 0 : index
    %c0_10 = arith.constant 0 : index
    %14 = vector.load %arg4[%c0_8, %c0_9, %c0_10] : memref<1x256x32xbf16, #tpu.memory_space<vmem>>, vector<1x256x32xbf16>
    %15 = vector.shape_cast %14 : vector<1x256x32xbf16> to vector<256x32xbf16>
    %16 = vector.shape_cast %13 : vector<256x32xbf16> to vector<1x256x32xbf16>
    tpu.vector_store %arg4[%c0_8, %c0_9, %c0_10], %16 {strides = array<i32>} : memref<1x256x32xbf16, #tpu.memory_space<vmem>>, vector<1x256x32xbf16>,
    return
  }
  func.func @transform_0(%arg0: i32) -> (i32, i32, i32) {
    %c0_i32 = arith.constant 0 : i32
    %c0_i32_0 = arith.constant 0 : i32
    %c0_i32_1 = arith.constant 0 : i32
    return %arg0, %c0_i32, %c0_i32_0 : i32, i32, i32
  }
  func.func @transform_1(%arg0: i32) -> (i32, i32) {
    %c0_i32 = arith.constant 0 : i32
    %c0_i32_0 = arith.constant 0 : i32
    %c0_i32_1 = arith.constant 0 : i32
    return %c0_i32, %c0_i32_0 : i32, i32
  }
  func.func @transform_2(%arg0: i32) -> (i32, i32) {
    %c0_i32 = arith.constant 0 : i32
    %c0_i32_0 = arith.constant 0 : i32
    %c0_i32_1 = arith.constant 0 : i32
    return %c0_i32, %c0_i32_0 : i32, i32
  }
  func.func @transform_3(%arg0: i32) -> (i32, i32, i32) {
    %c0_i32 = arith.constant 0 : i32
    %c0_i32_0 = arith.constant 0 : i32
    %c0_i32_1 = arith.constant 0 : i32
    return %arg0, %c0_i32, %c0_i32_0 : i32, i32, i32
  }
}

</mosaic_0001>

<llo_original>
// kernel: tpu_custom_call.1
$region0: #{tpu_custom_call.1}
  #allocation0 [shape = 'u32[]', space=smem, size = 0x4, offset = 0x4, fixed_abs, tag = 'smem constant byte address 0x4 - core index']
  #allocation1 [shape = 'u32[144,128]{1,0:T(1,128)}', space=vmem, size = 0x12000, scoped, tag = 'internal scratch']
  %s0 = inlined_call_operand.vmem [shape: bf16[2,256,9], index: 0, kind: input, shape index: {}]
  %s1 = inlined_call_operand.vmem [shape: bf16[9,32], index: 1, kind: input, shape index: {}]
  %s2 = inlined_call_operand.vmem [shape: f32[1,32], index: 2, kind: input, shape index: {}]
  %s3 = inlined_call_operand.vmem [shape: bf16[2,256,32], index: 3, kind: output, shape index: {}]
  %s4 = sld [smem:[#allocation0]]
  $region45: #{tpu_custom_call.1} parent=0
    _
  %s6 = ssub.s32 1, %s4
  %s7 = scalar_select 0, %s6, %s4
  loop: start=0, step=1, limit=4
  $region2: #{tpu_custom_call.1} parent=0 // loop_pre_header
    _
  $region3: #{tpu_custom_call.1} parent=0 // loop_header
    %s9 = sphi 0, %s13
    %p10 = scmp.ge.s32.totalorder %s9, 4
    %s19 = sphi 0, %s21
    %s22 = sphi 0, %s19
    %s23 = sphi 0, %s22
    %s39 = sphi 0, %s23
    %s43 = sphi 0, %s43
    %s45 = sphi 0, %s43
    %s46 = sphi 0, %s45
    %s60 = sphi 0, %s46
    %s64 = sphi 0, %s64
    %s66 = sphi 0, %s64
    %s67 = sphi 0, %s66
    %s81 = sphi 0, %s67
    %s87 = sphi 0, %s89
    %s90 = sphi 0, %s87
    %s91 = sphi 0, %s90
    %s107 = sphi 0, %s91
  $region4: #{tpu_custom_call.1} parent=0 // loop_header_branch
    %12 = sbr.rel (%p10) target = $region8
  $region5: #{tpu_custom_call.1} parent=0 // loop_body
    %s14 = ssub.s32 %s9, 1
    %s15 = ssub.s32 %s9, 2
    %s16 = sadd.s32 %s9, 1
    %s17 = ssub.s32 %s9, %s16
    %p18 = scmp.eq.s32.totalorder %s17, 0
    %s20 = sadd.s32 %s19, 1
    %s21 = scalar_select %p18, %s19, %s20
    %p24 = pneg %p18
    %p25 = scmp.eq.s32.totalorder %s9, 1
    %p26 = por %p24, %p25
    %p27 = scmp.ne.s32.totalorder %s19, %s22
    %p28 = scmp.eq.s32.totalorder %s9, 0
    %p29 = por %p27, %p28
    %p30 = scmp.ne.s32.totalorder %s19, %s22
    %p31 = scmp.eq.s32.totalorder %s14, 1
    %p32 = por %p30, %p31
    %p33 = scmp.ne.s32.totalorder %s22, %s23
    %p34 = scmp.eq.s32.totalorder %s14, 0
    %p35 = por %p33, %p34
    %p36 = scmp.ne.s32.totalorder %s22, %s23
    %p37 = scmp.eq.s32.totalorder %s15, 1
    %p38 = por %p36, %p37
    %p40 = scmp.ne.s32.totalorder %s23, %s39
    %p41 = scmp.eq.s32.totalorder %s15, 0
    %p42 = por %p40, %p41
    %s44 = sadd.s32 %s43, 1
    %p47 = scmp.eq.s32.totalorder %s9, 1
    %p48 = scmp.ne.s32.totalorder %s43, %s45
    %p49 = scmp.eq.s32.totalorder %s9, 0
    %p50 = por %p48, %p49
    %p51 = scmp.ne.s32.totalorder %s43, %s45
    %p52 = scmp.eq.s32.totalorder %s14, 1
    %p53 = por %p51, %p52
    %p54 = scmp.ne.s32.totalorder %s45, %s46
    %p55 = scmp.eq.s32.totalorder %s14, 0
    %p56 = por %p54, %p55
    %p57 = scmp.ne.s32.totalorder %s45, %s46
    %p58 = scmp.eq.s32.totalorder %s15, 1
    %p59 = por %p57, %p58
    %p61 = scmp.ne.s32.totalorder %s46, %s60
    %p62 = scmp.eq.s32.totalorder %s15, 0
    %p63 = por %p61, %p62
    %s65 = sadd.s32 %s64, 1
    %p68 = scmp.eq.s32.totalorder %s9, 1
    %p69 = scmp.ne.s32.totalorder %s64, %s66
    %p70 = scmp.eq.s32.totalorder %s9, 0
    %p71 = por %p69, %p70
    %p72 = scmp.ne.s32.totalorder %s64, %s66
    %p73 = scmp.eq.s32.totalorder %s14, 1
    %p74 = por %p72, %p73
    %p75 = scmp.ne.s32.totalorder %s66, %s67
    %p76 = scmp.eq.s32.totalorder %s14, 0
    %p77 = por %p75, %p76
    %p78 = scmp.ne.s32.totalorder %s66, %s67
    %p79 = scmp.eq.s32.totalorder %s15, 1
    %p80 = por %p78, %p79
    %p82 = scmp.ne.s32.totalorder %s67, %s81
    %p83 = scmp.eq.s32.totalorder %s15, 0
    %p84 = por %p82, %p83
    %s85 = ssub.s32 %s9, %s16
    %p86 = scmp.eq.s32.totalorder %s85, 0
    %s88 = sadd.s32 %s87, 1
    %s89 = scalar_select %p86, %s87, %s88
    %p92 = pneg %p86
    %p93 = scmp.eq.s32.totalorder %s9, 1
    %p94 = por %p92, %p93
    %p95 = scmp.ne.s32.totalorder %s87, %s90
    %p96 = scmp.eq.s32.totalorder %s9, 0
    %p97 = por %p95, %p96
    %p98 = scmp.ne.s32.totalorder %s87, %s90
    %p99 = scmp.eq.s32.totalorder %s14, 1
    %p100 = por %p98, %p99
    %p101 = scmp.ne.s32.totalorder %s90, %s91
    %p102 = scmp.eq.s32.totalorder %s14, 0
    %p103 = por %p101, %p102
    %p104 = scmp.ne.s32.totalorder %s90, %s91
    %p105 = scmp.eq.s32.totalorder %s15, 1
    %p106 = por %p104, %p105
    %p108 = scmp.ne.s32.totalorder %s91, %s107
    %p109 = scmp.eq.s32.totalorder %s15, 0
    %p110 = por %p108, %p109
    %p111 = scmp.le.s32.totalorder 1, %s9
    %p112 = scmp.lt.s32.totalorder %s9, 3
    %p113 = pnand %p111, %p112
    %p114 = pneg %p113
    // Predicated region
    $region9: #{tpu_custom_call.1} parent=5 // pred_check
      _
    $region10: #{tpu_custom_call.1} parent=5 // pred_check_branch
      %116 = sbr.rel (%p113) target = $region12
    $region11: #{tpu_custom_call.1} parent=5 // pred_region
      %s117 = ssub.s32 %s9, 1
      // Predicated region
      $region13: #{tpu_custom_call.1} parent=11 // pred_check
        %p118 = pneg %p56
      $region14: #{tpu_custom_call.1} parent=11 // pred_check_branch
        %120 = sbr.rel (%p118) target = $region16
      $region15: #{tpu_custom_call.1} parent=11 // pred_region
        _
      $region16: #{tpu_custom_call.1} parent=11 // pred_fallthru
        _
      // Predicated region
      $region17: #{tpu_custom_call.1} parent=11 // pred_check
        %p121 = pneg %p77
      $region18: #{tpu_custom_call.1} parent=11 // pred_check_branch
        %123 = sbr.rel (%p121) target = $region20
      $region19: #{tpu_custom_call.1} parent=11 // pred_region
        _
      $region20: #{tpu_custom_call.1} parent=11 // pred_fallthru
        _
    $region12: #{tpu_custom_call.1} parent=5 // pred_fallthru
      _
    %p124 = scmp.lt.s32.totalorder %s9, 2
    // Predicated region
    $region21: #{tpu_custom_call.1} parent=5 // pred_check
      %p125 = pneg %p124
    $region22: #{tpu_custom_call.1} parent=5 // pred_check_branch
      %127 = sbr.rel (%p125) target = $region24
    $region23: #{tpu_custom_call.1} parent=5 // pred_region
      // Predicated region
      $region25: #{tpu_custom_call.1} parent=23 // pred_check
        %p128 = pneg %p29
      $region26: #{tpu_custom_call.1} parent=23 // pred_check_branch
        %130 = sbr.rel (%p128) target = $region28
      $region27: #{tpu_custom_call.1} parent=23 // pred_region
        %p131 = scmp.lt.s32.totalorder %s9, 1
        %s132 = scalar_select %p131, %s9, 1
        %s133 = smul.addr %s132, 32
        %s134 = smul.addr %s133, 4
        %s135 = scalar_lea.vmem %s0, %s134
      $region28: #{tpu_custom_call.1} parent=23 // pred_fallthru
        _
    $region24: #{tpu_custom_call.1} parent=5 // pred_fallthru
      _
    %p136 = scmp.le.s32.totalorder 1, %s9
    %p137 = scmp.lt.s32.totalorder %s9, 3
    %p138 = pnand %p136, %p137
    %p139 = pneg %p138
    // Predicated region
    $region29: #{tpu_custom_call.1} parent=5 // pred_check
      _
    $region30: #{tpu_custom_call.1} parent=5 // pred_check_branch
      %141 = sbr.rel (%p138) target = $region32
    $region31: #{tpu_custom_call.1} parent=5 // pred_region
      %s142 = ssub.s32 %s9, 1
      %p143 = scmp.lt.s32.totalorder %s14, 1
      %s144 = scalar_select %p143, %s14, 1
      %s145 = smul.addr %s144, 32
      %s146 = smul.addr %s145, 4
      %s147 = scalar_lea.vmem %s0, %s146
      %p148 = pneg %p35
      %p149 = pneg %p32
      %p150 = pneg %p56
      %p151 = pneg %p53
      %p152 = pneg %p77
      %p153 = pneg %p74
      %p154 = pneg %p103
      %p155 = pneg %p100
      %p156 = scmp.lt.s32.totalorder %s14, 1
      %s157 = scalar_select %p156, %s14, 1
      %s158 = smul.addr %s157, 32
      %s159 = smul.addr %s158, 4
      %s160 = scalar_lea.vmem %s3, %s159
      %p161 = scmp.lt.s32.totalorder %s14, 1
      %s162 = scalar_select %p161, %s14, 1
      %s163 = smul.addr %s162, 32
      %s164 = smul.addr %s163, 4
      %s165 = scalar_lea.vmem %s0, %s164
      %p166 = scmp.lt.s32.totalorder %s14, 1
      %s167 = scalar_select %p166, %s14, 1
      %s168 = smul.addr %s167, 32
      %s169 = smul.addr %s168, 4
      %s170 = scalar_lea.vmem %s3, %s169
      %v171 = vld [vmem:[%s165] sm:$0xf]
      %v172 = vld [vmem:[%s165 + $0x4] sm:$0xf]
      %v173 = vld [vmem:[%s165 + $0x8] sm:$0xf]
      %v174 = vld [vmem:[%s165 + $0xc] sm:$0xf]
      %v175 = vld [vmem:[%s165 + $0x10] sm:$0xf]
      %v176 = vld [vmem:[%s165 + $0x14] sm:$0xf]
      %v177 = vld [vmem:[%s165 + $0x18] sm:$0xf]
      %v178 = vld [vmem:[%s165 + $0x1c] sm:$0xf]
      %v179 = vld [vmem:[%s165 + $0x20] sm:$0xf]
      %v180 = vld [vmem:[%s165 + $0x24] sm:$0xf]
      %v181 = vld [vmem:[%s165 + $0x28] sm:$0xf]
      %v182 = vld [vmem:[%s165 + $0x2c] sm:$0xf]
      %v183 = vld [vmem:[%s165 + $0x30] sm:$0xf]
      %v184 = vld [vmem:[%s165 + $0x34] sm:$0xf]
      %v185 = vld [vmem:[%s165 + $0x38] sm:$0xf]
      %v186 = vld [vmem:[%s165 + $0x3c] sm:$0xf]
      %v187 = vld [vmem:[%s165 + $0x40] sm:$0xf]
      %v188 = vld [vmem:[%s165 + $0x44] sm:$0xf]
      %v189 = vld [vmem:[%s165 + $0x48] sm:$0xf]
      %v190 = vld [vmem:[%s165 + $0x4c] sm:$0xf]
      %v191 = vld [vmem:[%s165 + $0x50] sm:$0xf]
      %v192 = vld [vmem:[%s165 + $0x54] sm:$0xf]
      %v193 = vld [vmem:[%s165 + $0x58] sm:$0xf]
      %v194 = vld [vmem:[%s165 + $0x5c] sm:$0xf]
      %v195 = vld [vmem:[%s165 + $0x60] sm:$0xf]
      %v196 = vld [vmem:[%s165 + $0x64] sm:$0xf]
      %v197 = vld [vmem:[%s165 + $0x68] sm:$0xf]
      %v198 = vld [vmem:[%s165 + $0x6c] sm:$0xf]
      %v199 = vld [vmem:[%s165 + $0x70] sm:$0xf]
      %v200 = vld [vmem:[%s165 + $0x74] sm:$0xf]
      %v201 = vld [vmem:[%s165 + $0x78] sm:$0xf]
      %v202 = vld [vmem:[%s165 + $0x7c] sm:$0xf]
      %v203 = vunpack.c.l.bf16 %v171
      %v204 = vunpack.c.l.bf16 %v172
      %v205 = vunpack.c.l.bf16 %v173
      %v206 = vunpack.c.l.bf16 %v174
      %v207 = vunpack.c.l.bf16 %v175
      %v208 = vunpack.c.l.bf16 %v176
      %v209 = vunpack.c.l.bf16 %v177
      %v210 = vunpack.c.l.bf16 %v178
      %v211 = vunpack.c.l.bf16 %v179
      %v212 = vunpack.c.l.bf16 %v180
      %v213 = vunpack.c.l.bf16 %v181
      %v214 = vunpack.c.l.bf16 %v182
      %v215 = vunpack.c.l.bf16 %v183
      %v216 = vunpack.c.l.bf16 %v184
      %v217 = vunpack.c.l.bf16 %v185
      %v218 = vunpack.c.l.bf16 %v186
      %v219 = vunpack.c.l.bf16 %v187
      %v220 = vunpack.c.l.bf16 %v188
      %v221 = vunpack.c.l.bf16 %v189
      %v222 = vunpack.c.l.bf16 %v190
      %v223 = vunpack.c.l.bf16 %v191
      %v224 = vunpack.c.l.bf16 %v192
      %v225 = vunpack.c.l.bf16 %v193
      %v226 = vunpack.c.l.bf16 %v194
      %v227 = vunpack.c.l.bf16 %v195
      %v228 = vunpack.c.l.bf16 %v196
      %v229 = vunpack.c.l.bf16 %v197
      %v230 = vunpack.c.l.bf16 %v198
      %v231 = vunpack.c.l.bf16 %v199
      %v232 = vunpack.c.l.bf16 %v200
      %v233 = vunpack.c.l.bf16 %v201
      %v234 = vunpack.c.l.bf16 %v202
      %v235 = vld [vmem:[%s1] sm:$0xf]
      %v236 = vld [vmem:[%s1 + $0x4] sm:$0x1]
      %v237 = vunpack.c.l.bf16 %v235
      %v238 = vunpack.c.l.bf16 %v236
      %v239 = vld [vmem:[%s2] sm:$0x1]
      %v241 = vlaneseq
      %v242 = vshrl.u32 %v241, 7
      %v243 = vsub.s32 0, %v242
      %v244 = vrot.slane %v239, %v243
      %vm246 = vcmask 72704
      %v248 = vsel %vm246, %v203, 0
      %v251 = vsel %vm246, %v204, 0
      %v254 = vsel %vm246, %v205, 0
      %v257 = vsel %vm246, %v206, 0
      %v260 = vsel %vm246, %v207, 0
      %v263 = vsel %vm246, %v208, 0
      %v266 = vsel %vm246, %v209, 0
      %v269 = vsel %vm246, %v210, 0
      %v272 = vsel %vm246, %v211, 0
      %v275 = vsel %vm246, %v212, 0
      %v278 = vsel %vm246, %v213, 0
      %v281 = vsel %vm246, %v214, 0
      %v284 = vsel %vm246, %v215, 0
      %v287 = vsel %vm246, %v216, 0
      %v290 = vsel %vm246, %v217, 0
      %v293 = vsel %vm246, %v218, 0
      %v296 = vsel %vm246, %v219, 0
      %v299 = vsel %vm246, %v220, 0
      %v302 = vsel %vm246, %v221, 0
      %v305 = vsel %vm246, %v222, 0
      %v308 = vsel %vm246, %v223, 0
      %v311 = vsel %vm246, %v224, 0
      %v314 = vsel %vm246, %v225, 0
      %v317 = vsel %vm246, %v226, 0
      %v320 = vsel %vm246, %v227, 0
      %v323 = vsel %vm246, %v228, 0
      %v326 = vsel %vm246, %v229, 0
      %v329 = vsel %vm246, %v230, 0
      %v332 = vsel %vm246, %v231, 0
      %v335 = vsel %vm246, %v232, 0
      %v338 = vsel %vm246, %v233, 0
      %v341 = vsel %vm246, %v234, 0
      %vm343 = vcmask 1040384
      %v345 = vsel %vm343, %v238, 0
      %347 = vmatprep.subr.mxu0 0.0
      %348 = vmatpush1.msra.mxu0 %v237
      %349 = vmatprep.subr.mxu0 0.0
      %350 = vmatpush1.msra.mxu0 %v345
      %351 = vmatprep.subr.mxu0 0.0
      %352 = vmatpush1.msra.mxu0 0.0
      %353 = vmatprep.subr.mxu0 0.0
      %354 = vmatpush1.msra.mxu0 0.0
      %355 = vmatprep.subr.mxu0 0.0
      %356 = vmatpush1.msra.mxu0 0.0
      %357 = vmatprep.subr.mxu0 0.0
      %358 = vmatpush1.msra.mxu0 0.0
      %359 = vmatprep.subr.mxu0 0.0
      %360 = vmatpush1.msra.mxu0 0.0
      %361 = vmatprep.subr.mxu0 0.0
      %362 = vmatpush1.msra.mxu0 0.0
      %363 = vmatprep.subr.mxu0 0.0
      %364 = vmatpush1.msra.mxu0 0.0
      %365 = vmatprep.subr.mxu0 0.0
      %366 = vmatpush1.msra.mxu0 0.0
      %367 = vmatprep.subr.mxu0 0.0
      %368 = vmatpush1.msra.mxu0 0.0
      %369 = vmatprep.subr.mxu0 0.0
      %370 = vmatpush1.msra.mxu0 0.0
      %371 = vmatprep.subr.mxu0 0.0
      %372 = vmatpush1.msra.mxu0 0.0
      %373 = vmatprep.subr.mxu0 0.0
      %374 = vmatpush1.msra.mxu0 0.0
      %375 = vmatprep.subr.mxu0 0.0
      %376 = vmatpush1.msra.mxu0 0.0
      %377 = vmatprep.subr.mxu0 0.0
      %378 = vmatpush1.msra.mxu0 0.0
      %379 = vmatprep.subr.mxu0 0.0
      %380 = vmatpush1.msra.mxu0 0.0
      %381 = vmatprep.subr.mxu0 0.0
      %382 = vmatpush1.msra.mxu0 0.0
      %383 = vmatprep.subr.mxu0 0.0
      %384 = vmatpush1.msra.mxu0 0.0
      %385 = vmatprep.subr.mxu0 0.0
      %386 = vmatpush1.msra.mxu0 0.0
      %387 = vmatprep.subr.mxu0 0.0
      %388 = vmatpush1.msra.mxu0 0.0
      %389 = vmatprep.subr.mxu0 0.0
      %390 = vmatpush1.msra.mxu0 0.0
      %391 = vmatprep.subr.mxu0 0.0
      %392 = vmatpush1.msra.mxu0 0.0
      %393 = vmatprep.subr.mxu0 0.0
      %394 = vmatpush1.msra.mxu0 0.0
      %395 = vmatprep.subr.mxu0 0.0
      %396 = vmatpush1.msra.mxu0 0.0
      %397 = vmatprep.subr.mxu0 0.0
      %398 = vmatpush1.msra.mxu0 0.0
      %399 = vmatprep.subr.mxu0 0.0
      %400 = vmatpush1.msra.mxu0 0.0
      %401 = vmatprep.subr.mxu0 0.0
      %402 = vmatpush1.msra.mxu0 0.0
      %403 = vmatprep.subr.mxu0 0.0
      %404 = vmatpush1.msra.mxu0 0.0
      %405 = vmatprep.subr.mxu0 0.0
      %406 = vmatpush1.msra.mxu0 0.0
      %407 = vmatprep.subr.mxu0 0.0
      %408 = vmatpush1.msra.mxu0 0.0
      %409 = vmatprep.subr.mxu0 0.0
      %410 = vmatpush1.msra.mxu0 0.0
      %411 = vmatprep.mubr.f32.mxu0 0.0
      %412 = vmatmul.mubr.f32.gmra.mrb[0].mxu0 %v248
      %v413 = vpop.f32.mrb[0].mxu0
      %v414 = vadd.f32 %v244, %v413
      %v415 = vpop.f32.mrb[0].mxu0
      %416 = vmatprep.mubr.f32.mxu0 0.0
      %417 = vmatmul.mubr.f32.gmra.mrb[0].mxu0 %v251
      %v418 = vpop.f32.mrb[0].mxu0
      %v419 = vadd.f32 %v244, %v418
      %v420 = vpop.f32.mrb[0].mxu0
      %421 = vmatprep.mubr.f32.mxu0 0.0
      %422 = vmatmul.mubr.f32.gmra.mrb[0].mxu0 %v254
      %v423 = vpop.f32.mrb[0].mxu0
      %v424 = vadd.f32 %v244, %v423
      %v425 = vpop.f32.mrb[0].mxu0
      %426 = vmatprep.mubr.f32.mxu0 0.0
      %427 = vmatmul.mubr.f32.gmra.mrb[0].mxu0 %v257
      %v428 = vpop.f32.mrb[0].mxu0
      %v429 = vadd.f32 %v244, %v428
      %v430 = vpop.f32.mrb[0].mxu0
      %431 = vmatprep.mubr.f32.mxu0 0.0
      %432 = vmatmul.mubr.f32.gmra.mrb[0].mxu0 %v260
      %v433 = vpop.f32.mrb[0].mxu0
      %v434 = vadd.f32 %v244, %v433
      %v435 = vpop.f32.mrb[0].mxu0
      %436 = vmatprep.mubr.f32.mxu0 0.0
      %437 = vmatmul.mubr.f32.gmra.mrb[0].mxu0 %v263
      %v438 = vpop.f32.mrb[0].mxu0
      %v439 = vadd.f32 %v244, %v438
      %v440 = vpop.f32.mrb[0].mxu0
      %441 = vmatprep.mubr.f32.mxu0 0.0
      %442 = vmatmul.mubr.f32.gmra.mrb[0].mxu0 %v266
      %v443 = vpop.f32.mrb[0].mxu0
      %v444 = vadd.f32 %v244, %v443
      %v445 = vpop.f32.mrb[0].mxu0
      %446 = vmatprep.mubr.f32.mxu0 0.0
      %447 = vmatmul.mubr.f32.gmra.mrb[0].mxu0 %v269
      %v448 = vpop.f32.mrb[0].mxu0
      %v449 = vadd.f32 %v244, %v448
      %v450 = vpop.f32.mrb[0].mxu0
      %451 = vmatprep.mubr.f32.mxu0 0.0
      %452 = vmatmul.mubr.f32.gmra.mrb[0].mxu0 %v272
      %v453 = vpop.f32.mrb[0].mxu0
      %v454 = vadd.f32 %v244, %v453
      %v455 = vpop.f32.mrb[0].mxu0
      %456 = vmatprep.mubr.f32.mxu0 0.0
      %457 = vmatmul.mubr.f32.gmra.mrb[0].mxu0 %v275
      %v458 = vpop.f32.mrb[0].mxu0
      %v459 = vadd.f32 %v244, %v458
      %v460 = vpop.f32.mrb[0].mxu0
      %461 = vmatprep.mubr.f32.mxu0 0.0
      %462 = vmatmul.mubr.f32.gmra.mrb[0].mxu0 %v278
      %v463 = vpop.f32.mrb[0].mxu0
      %v464 = vadd.f32 %v244, %v463
      %v465 = vpop.f32.mrb[0].mxu0
      %466 = vmatprep.mubr.f32.mxu0 0.0
      %467 = vmatmul.mubr.f32.gmra.mrb[0].mxu0 %v281
      %v468 = vpop.f32.mrb[0].mxu0
      %v469 = vadd.f32 %v244, %v468
      %v470 = vpop.f32.mrb[0].mxu0
      %471 = vmatprep.mubr.f32.mxu0 0.0
      %472 = vmatmul.mubr.f32.gmra.mrb[0].mxu0 %v284
      %v473 = vpop.f32.mrb[0].mxu0
      %v474 = vadd.f32 %v244, %v473
      %v475 = vpop.f32.mrb[0].mxu0
      %476 = vmatprep.mubr.f32.mxu0 0.0
      %477 = vmatmul.mubr.f32.gmra.mrb[0].mxu0 %v287
      %v478 = vpop.f32.mrb[0].mxu0
      %v479 = vadd.f32 %v244, %v478
      %v480 = vpop.f32.mrb[0].mxu0
      %481 = vmatprep.mubr.f32.mxu0 0.0
      %482 = vmatmul.mubr.f32.gmra.mrb[0].mxu0 %v290
      %v483 = vpop.f32.mrb[0].mxu0
      %v484 = vadd.f32 %v244, %v483
      %v485 = vpop.f32.mrb[0].mxu0
      %486 = vmatprep.mubr.f32.mxu0 0.0
      %487 = vmatmul.mubr.f32.gmra.mrb[0].mxu0 %v293
      %v488 = vpop.f32.mrb[0].mxu0
      %v489 = vadd.f32 %v244, %v488
      %v490 = vpop.f32.mrb[0].mxu0
      %491 = vmatprep.mubr.f32.mxu0 0.0
      %492 = vmatmul.mubr.f32.gmra.mrb[0].mxu0 %v296
      %v493 = vpop.f32.mrb[0].mxu0
      %v494 = vadd.f32 %v244, %v493
      %v495 = vpop.f32.mrb[0].mxu0
      %496 = vmatprep.mubr.f32.mxu0 0.0
      %497 = vmatmul.mubr.f32.gmra.mrb[0].mxu0 %v299
      %v498 = vpop.f32.mrb[0].mxu0
      %v499 = vadd.f32 %v244, %v498
      %v500 = vpop.f32.mrb[0].mxu0
      %501 = vmatprep.mubr.f32.mxu0 0.0
      %502 = vmatmul.mubr.f32.gmra.mrb[0].mxu0 %v302
      %v503 = vpop.f32.mrb[0].mxu0
      %v504 = vadd.f32 %v244, %v503
      %v505 = vpop.f32.mrb[0].mxu0
      %506 = vmatprep.mubr.f32.mxu0 0.0
      %507 = vmatmul.mubr.f32.gmra.mrb[0].mxu0 %v305
      %v508 = vpop.f32.mrb[0].mxu0
      %v509 = vadd.f32 %v244, %v508
      %v510 = vpop.f32.mrb[0].mxu0
      %511 = vmatprep.mubr.f32.mxu0 0.0
      %512 = vmatmul.mubr.f32.gmra.mrb[0].mxu0 %v308
      %v513 = vpop.f32.mrb[0].mxu0
      %v514 = vadd.f32 %v244, %v513
      %v515 = vpop.f32.mrb[0].mxu0
      %516 = vmatprep.mubr.f32.mxu0 0.0
      %517 = vmatmul.mubr.f32.gmra.mrb[0].mxu0 %v311
      %v518 = vpop.f32.mrb[0].mxu0
      %v519 = vadd.f32 %v244, %v518
      %v520 = vpop.f32.mrb[0].mxu0
      %521 = vmatprep.mubr.f32.mxu0 0.0
      %522 = vmatmul.mubr.f32.gmra.mrb[0].mxu0 %v314
      %v523 = vpop.f32.mrb[0].mxu0
      %v524 = vadd.f32 %v244, %v523
      %v525 = vpop.f32.mrb[0].mxu0
      %526 = vmatprep.mubr.f32.mxu0 0.0
      %527 = vmatmul.mubr.f32.gmra.mrb[0].mxu0 %v317
      %v528 = vpop.f32.mrb[0].mxu0
      %v529 = vadd.f32 %v244, %v528
      %v530 = vpop.f32.mrb[0].mxu0
      %531 = vmatprep.mubr.f32.mxu0 0.0
      %532 = vmatmul.mubr.f32.gmra.mrb[0].mxu0 %v320
      %v533 = vpop.f32.mrb[0].mxu0
      %v534 = vadd.f32 %v244, %v533
      %v535 = vpop.f32.mrb[0].mxu0
      %536 = vmatprep.mubr.f32.mxu0 0.0
      %537 = vmatmul.mubr.f32.gmra.mrb[0].mxu0 %v323
      %v538 = vpop.f32.mrb[0].mxu0
      %v539 = vadd.f32 %v244, %v538
      %v540 = vpop.f32.mrb[0].mxu0
      %541 = vmatprep.mubr.f32.mxu0 0.0
      %542 = vmatmul.mubr.f32.gmra.mrb[0].mxu0 %v326
      %v543 = vpop.f32.mrb[0].mxu0
      %v544 = vadd.f32 %v244, %v543
      %v545 = vpop.f32.mrb[0].mxu0
      %546 = vmatprep.mubr.f32.mxu0 0.0
      %547 = vmatmul.mubr.f32.gmra.mrb[0].mxu0 %v329
      %v548 = vpop.f32.mrb[0].mxu0
      %v549 = vadd.f32 %v244, %v548
      %v550 = vpop.f32.mrb[0].mxu0
      %551 = vmatprep.mubr.f32.mxu0 0.0
      %552 = vmatmul.mubr.f32.gmra.mrb[0].mxu0 %v332
      %v553 = vpop.f32.mrb[0].mxu0
      %v554 = vadd.f32 %v244, %v553
      %v555 = vpop.f32.mrb[0].mxu0
      %556 = vmatprep.mubr.f32.mxu0 0.0
      %557 = vmatmul.mubr.f32.gmra.mrb[0].mxu0 %v335
      %v558 = vpop.f32.mrb[0].mxu0
      %v559 = vadd.f32 %v244, %v558
      %v560 = vpop.f32.mrb[0].mxu0
      %561 = vmatprep.mubr.f32.mxu0 0.0
      %562 = vmatmul.mubr.f32.gmra.mrb[0].mxu0 %v338
      %v563 = vpop.f32.mrb[0].mxu0
      %v564 = vadd.f32 %v244, %v563
      %v565 = vpop.f32.mrb[0].mxu0
      %566 = vmatprep.mubr.f32.mxu0 0.0
      %567 = vmatmul.mubr.f32.gmra.mrb[0].mxu0 %v341
      %v568 = vpop.f32.mrb[0].mxu0
      %v569 = vadd.f32 %v244, %v568
      %v570 = vpop.f32.mrb[0].mxu0
      %571 = vdwg.mxu0
      %v572 = vmax.f32 %v414, 0.0
      %v573 = vmax.f32 %v419, 0.0
      %v574 = vmax.f32 %v424, 0.0
      %v575 = vmax.f32 %v429, 0.0
      %v576 = vmax.f32 %v434, 0.0
      %v577 = vmax.f32 %v439, 0.0
      %v578 = vmax.f32 %v444, 0.0
      %v579 = vmax.f32 %v449, 0.0
      %v580 = vmax.f32 %v454, 0.0
      %v581 = vmax.f32 %v459, 0.0
      %v582 = vmax.f32 %v464, 0.0
      %v583 = vmax.f32 %v469, 0.0
      %v584 = vmax.f32 %v474, 0.0
      %v585 = vmax.f32 %v479, 0.0
      %v586 = vmax.f32 %v484, 0.0
      %v587 = vmax.f32 %v489, 0.0
      %v588 = vmax.f32 %v494, 0.0
      %v589 = vmax.f32 %v499, 0.0
      %v590 = vmax.f32 %v504, 0.0
      %v591 = vmax.f32 %v509, 0.0
      %v592 = vmax.f32 %v514, 0.0
      %v593 = vmax.f32 %v519, 0.0
      %v594 = vmax.f32 %v524, 0.0
      %v595 = vmax.f32 %v529, 0.0
      %v596 = vmax.f32 %v534, 0.0
      %v597 = vmax.f32 %v539, 0.0
      %v598 = vmax.f32 %v544, 0.0
      %v599 = vmax.f32 %v549, 0.0
      %v600 = vmax.f32 %v554, 0.0
      %v601 = vmax.f32 %v559, 0.0
      %v602 = vmax.f32 %v564, 0.0
      %v603 = vmax.f32 %v569, 0.0
      %v604 = vmin.f32 %v572, 6.0
      %v605 = vmin.f32 %v573, 6.0
      %v606 = vmin.f32 %v574, 6.0
      %v607 = vmin.f32 %v575, 6.0
      %v608 = vmin.f32 %v576, 6.0
      %v609 = vmin.f32 %v577, 6.0
      %v610 = vmin.f32 %v578, 6.0
      %v611 = vmin.f32 %v579, 6.0
      %v612 = vmin.f32 %v580, 6.0
      %v613 = vmin.f32 %v581, 6.0
      %v614 = vmin.f32 %v582, 6.0
      %v615 = vmin.f32 %v583, 6.0
      %v616 = vmin.f32 %v584, 6.0
      %v617 = vmin.f32 %v585, 6.0
      %v618 = vmin.f32 %v586, 6.0
      %v619 = vmin.f32 %v587, 6.0
      %v620 = vmin.f32 %v588, 6.0
      %v621 = vmin.f32 %v589, 6.0
      %v622 = vmin.f32 %v590, 6.0
      %v623 = vmin.f32 %v591, 6.0
      %v624 = vmin.f32 %v592, 6.0
      %v625 = vmin.f32 %v593, 6.0
      %v626 = vmin.f32 %v594, 6.0
      %v627 = vmin.f32 %v595, 6.0
      %v628 = vmin.f32 %v596, 6.0
      %v629 = vmin.f32 %v597, 6.0
      %v630 = vmin.f32 %v598, 6.0
      %v631 = vmin.f32 %v599, 6.0
      %v632 = vmin.f32 %v600, 6.0
      %v633 = vmin.f32 %v601, 6.0
      %v634 = vmin.f32 %v602, 6.0
      %v635 = vmin.f32 %v603, 6.0
      %v636 = vpack.c.bf16 %v605, %v604
      %v637 = vpack.c.bf16 %v607, %v606
      %v638 = vpack.c.bf16 %v609, %v608
      %v639 = vpack.c.bf16 %v611, %v610
      %v640 = vpack.c.bf16 %v613, %v612
      %v641 = vpack.c.bf16 %v615, %v614
      %v642 = vpack.c.bf16 %v617, %v616
      %v643 = vpack.c.bf16 %v619, %v618
      %v644 = vpack.c.bf16 %v621, %v620
      %v645 = vpack.c.bf16 %v623, %v622
      %v646 = vpack.c.bf16 %v625, %v624
      %v647 = vpack.c.bf16 %v627, %v626
      %v648 = vpack.c.bf16 %v629, %v628
      %v649 = vpack.c.bf16 %v631, %v630
      %v650 = vpack.c.bf16 %v633, %v632
      %v651 = vpack.c.bf16 %v635, %v634
      %v668 = vunpack.c.l.b16 %v636
      %v669 = vunpack.c.h.b16 %v636
      %v670 = vunpack.c.l.b16 %v637
      %v671 = vunpack.c.h.b16 %v637
      %v672 = vunpack.c.l.b16 %v638
      %v673 = vunpack.c.h.b16 %v638
      %v674 = vunpack.c.l.b16 %v639
      %v675 = vunpack.c.h.b16 %v639
      %v676 = vunpack.c.l.b16 %v640
      %v677 = vunpack.c.h.b16 %v640
      %v678 = vunpack.c.l.b16 %v641
      %v679 = vunpack.c.h.b16 %v641
      %v680 = vunpack.c.l.b16 %v642
      %v681 = vunpack.c.h.b16 %v642
      %v682 = vunpack.c.l.b16 %v643
      %v683 = vunpack.c.h.b16 %v643
      %v684 = vunpack.c.l.b16 %v644
      %v685 = vunpack.c.h.b16 %v644
      %v686 = vunpack.c.l.b16 %v645
      %v687 = vunpack.c.h.b16 %v645
      %v688 = vunpack.c.l.b16 %v646
      %v689 = vunpack.c.h.b16 %v646
      %v690 = vunpack.c.l.b16 %v647
      %v691 = vunpack.c.h.b16 %v647
      %v692 = vunpack.c.l.b16 %v648
      %v693 = vunpack.c.h.b16 %v648
      %v694 = vunpack.c.l.b16 %v649
      %v695 = vunpack.c.h.b16 %v649
      %v696 = vunpack.c.l.b16 %v650
      %v697 = vunpack.c.h.b16 %v650
      %v698 = vunpack.c.l.b16 %v651
      %v699 = vunpack.c.h.b16 %v651
      %v700 = vpack.c.b16 %v668, %v668
      %v701 = vpack.c.b16 %v669, %v669
      %v702 = vpack.c.b16 %v670, %v670
      %v703 = vpack.c.b16 %v671, %v671
      %v704 = vpack.c.b16 %v672, %v672
      %v705 = vpack.c.b16 %v673, %v673
      %v706 = vpack.c.b16 %v674, %v674
      %v707 = vpack.c.b16 %v675, %v675
      %v708 = vpack.c.b16 %v676, %v676
      %v709 = vpack.c.b16 %v677, %v677
      %v710 = vpack.c.b16 %v678, %v678
      %v711 = vpack.c.b16 %v679, %v679
      %v712 = vpack.c.b16 %v680, %v680
      %v713 = vpack.c.b16 %v681, %v681
      %v714 = vpack.c.b16 %v682, %v682
      %v715 = vpack.c.b16 %v683, %v683
      %v716 = vpack.c.b16 %v684, %v684
      %v717 = vpack.c.b16 %v685, %v685
      %v718 = vpack.c.b16 %v686, %v686
      %v719 = vpack.c.b16 %v687, %v687
      %v720 = vpack.c.b16 %v688, %v688
      %v721 = vpack.c.b16 %v689, %v689
      %v722 = vpack.c.b16 %v690, %v690
      %v723 = vpack.c.b16 %v691, %v691
      %v724 = vpack.c.b16 %v692, %v692
      %v725 = vpack.c.b16 %v693, %v693
      %v726 = vpack.c.b16 %v694, %v694
      %v727 = vpack.c.b16 %v695, %v695
      %v728 = vpack.c.b16 %v696, %v696
      %v729 = vpack.c.b16 %v697, %v697
      %v730 = vpack.c.b16 %v698, %v698
      %v731 = vpack.c.b16 %v699, %v699
      %vm764 = vcmask 257024
      %765 = vst.msk [vmem:[%s170] sm:$0xf] %vm764, %v700
      %766 = vst.msk [vmem:[%s170 + $0x4] sm:$0xf] %vm764, %v701
      %767 = vst.msk [vmem:[%s170 + $0x8] sm:$0xf] %vm764, %v702
      %768 = vst.msk [vmem:[%s170 + $0xc] sm:$0xf] %vm764, %v703
      %769 = vst.msk [vmem:[%s170 + $0x10] sm:$0xf] %vm764, %v704
      %770 = vst.msk [vmem:[%s170 + $0x14] sm:$0xf] %vm764, %v705
      %771 = vst.msk [vmem:[%s170 + $0x18] sm:$0xf] %vm764, %v706
      %772 = vst.msk [vmem:[%s170 + $0x1c] sm:$0xf] %vm764, %v707
      %773 = vst.msk [vmem:[%s170 + $0x20] sm:$0xf] %vm764, %v708
      %774 = vst.msk [vmem:[%s170 + $0x24] sm:$0xf] %vm764, %v709
      %775 = vst.msk [vmem:[%s170 + $0x28] sm:$0xf] %vm764, %v710
      %776 = vst.msk [vmem:[%s170 + $0x2c] sm:$0xf] %vm764, %v711
      %777 = vst.msk [vmem:[%s170 + $0x30] sm:$0xf] %vm764, %v712
      %778 = vst.msk [vmem:[%s170 + $0x34] sm:$0xf] %vm764, %v713
      %779 = vst.msk [vmem:[%s170 + $0x38] sm:$0xf] %vm764, %v714
      %780 = vst.msk [vmem:[%s170 + $0x3c] sm:$0xf] %vm764, %v715
      %781 = vst.msk [vmem:[%s170 + $0x40] sm:$0xf] %vm764, %v716
      %782 = vst.msk [vmem:[%s170 + $0x44] sm:$0xf] %vm764, %v717
      %783 = vst.msk [vmem:[%s170 + $0x48] sm:$0xf] %vm764, %v718
      %784 = vst.msk [vmem:[%s170 + $0x4c] sm:$0xf] %vm764, %v719
      %785 = vst.msk [vmem:[%s170 + $0x50] sm:$0xf] %vm764, %v720
      %786 = vst.msk [vmem:[%s170 + $0x54] sm:$0xf] %vm764, %v721
      %787 = vst.msk [vmem:[%s170 + $0x58] sm:$0xf] %vm764, %v722
      %788 = vst.msk [vmem:[%s170 + $0x5c] sm:$0xf] %vm764, %v723
      %789 = vst.msk [vmem:[%s170 + $0x60] sm:$0xf] %vm764, %v724
      %790 = vst.msk [vmem:[%s170 + $0x64] sm:$0xf] %vm764, %v725
      %791 = vst.msk [vmem:[%s170 + $0x68] sm:$0xf] %vm764, %v726
      %792 = vst.msk [vmem:[%s170 + $0x6c] sm:$0xf] %vm764, %v727
      %793 = vst.msk [vmem:[%s170 + $0x70] sm:$0xf] %vm764, %v728
      %794 = vst.msk [vmem:[%s170 + $0x74] sm:$0xf] %vm764, %v729
      %795 = vst.msk [vmem:[%s170 + $0x78] sm:$0xf] %vm764, %v730
      %796 = vst.msk [vmem:[%s170 + $0x7c] sm:$0xf] %vm764, %v731
      %p797 = scmp.lt.s32.totalorder %s14, 1
      %s798 = scalar_select %p797, %s14, 1
      %s799 = smul.addr %s798, 32
      %s800 = smul.addr %s799, 4
      %s801 = scalar_lea.vmem %s3, %s800
      // Predicated region
      $region33: #{tpu_custom_call.1} parent=31 // pred_check
        %p802 = pneg %p100
      $region34: #{tpu_custom_call.1} parent=31 // pred_check_branch
        %804 = sbr.rel (%p802) target = $region36
      $region35: #{tpu_custom_call.1} parent=31 // pred_region
        _
      $region36: #{tpu_custom_call.1} parent=31 // pred_fallthru
        _
    $region32: #{tpu_custom_call.1} parent=5 // pred_fallthru
      _
    %p805 = scmp.le.s32.totalorder 2, %s9
    // Predicated region
    $region37: #{tpu_custom_call.1} parent=5 // pred_check
      %p806 = pneg %p805
    $region38: #{tpu_custom_call.1} parent=5 // pred_check_branch
      %808 = sbr.rel (%p806) target = $region40
    $region39: #{tpu_custom_call.1} parent=5 // pred_region
      %s809 = ssub.s32 %s9, 2
      // Predicated region
      $region41: #{tpu_custom_call.1} parent=39 // pred_check
        %p810 = pneg %p106
      $region42: #{tpu_custom_call.1} parent=39 // pred_check_branch
        %812 = sbr.rel (%p810) target = $region44
      $region43: #{tpu_custom_call.1} parent=39 // pred_region
        %p813 = scmp.lt.s32.totalorder %s15, 1
        %s814 = scalar_select %p813, %s15, 1
        %s815 = smul.addr %s814, 32
        %s816 = smul.addr %s815, 4
        %s817 = scalar_lea.vmem %s3, %s816
      $region44: #{tpu_custom_call.1} parent=39 // pred_fallthru
        _
    $region40: #{tpu_custom_call.1} parent=5 // pred_fallthru
      _
  $region6: #{tpu_custom_call.1} parent=0 // loop_footer
    %s13 = sadd.s32 1, %s9
  $region7: #{tpu_custom_call.1} parent=0 // loop_footer_branch
    %8 = sbr.rel target = $region3
  $region8: #{tpu_custom_call.1} parent=0 // loop_exit
    _

</llo_original>
